<compile_context>
chip_gen: v7x
topology: tpu7x:2x2x1
jax: 0.10.0
libtpu: 0.0.40
codegen_flags: <defaults>
</compile_context>

<pallas_src>
import jax
import jax.numpy as jnp
from jax.experimental import pallas as pl
from jax.experimental.pallas import tpu as pltpu


def _round_up(a, b):
    return ((a + b - 1) // b) * b


def _mclnpmil_kernel(scalars_ref, n_ref, x_ref, w_ref, b_ref,
                     yprob_ref, yprobs_ref, acc_ref):
    """Grid axis 0 tiles the bag dimension N (reduction axis, 'arbitrary').

    scalars_ref: SMEM f32[3] = [norm_p, 1/norm_p, 1/N]
    n_ref:       SMEM i32[1] = [N] (actual, unpadded bag size)
    x_ref:       VMEM (TILE_N, I)        current N-tile of the input
    w_ref:       VMEM (I, O_pad)         transposed, zero-padded weight (resident)
    b_ref:       VMEM (1, O_pad)         zero-padded bias (resident)
    yprob_ref:   VMEM (1, O_pad)         pooled output (resident, written last step)
    yprobs_ref:  VMEM (TILE_N, O_pad)    per-tile |logits| output (streams out)
    acc_ref:     VMEM (TILE_N, O_pad)    f32 accumulator of y**norm_p (resident)
    """
    i = pl.program_id(0)
    n_tiles = pl.num_programs(0)

    @pl.when(i == 0)
    def _init():
        acc_ref[...] = jnp.zeros_like(acc_ref)

    # MXU: (TILE_N, I) @ (I, O_pad) with f32 accumulate.
    logits = jnp.dot(x_ref[...], w_ref[...], preferred_element_type=jnp.float32)
    logits = logits + b_ref[...]                      # broadcast (1, O_pad)
    y_probs = jnp.abs(logits)                         # (TILE_N, O_pad)
    yprobs_ref[...] = y_probs                         # lane-dense full vst

    norm_p = scalars_ref[0]
    tile_n = yprobs_ref.shape[0]

    # Mask rows beyond the real bag size (only matters when N was padded up
    # to the tile size); padded rows would otherwise contribute |bias|**p.
    row_ids = i * tile_n + jax.lax.broadcasted_iota(jnp.int32, y_probs.shape, 0)
    valid = row_ids < n_ref[0]
    y_pow = jnp.where(valid, y_probs ** norm_p, 0.0)

    # VPU-only accumulation per tile; XLU reduce deferred to finalize.
    acc_ref[...] += y_pow

    @pl.when(i == n_tiles - 1)
    def _finalize():
        inv_norm_p = scalars_ref[1]
        inv_n = scalars_ref[2]
        pooled = jnp.sum(acc_ref[...], axis=0, keepdims=True) * inv_n   # (1, O_pad)
        yprob_ref[...] = pooled ** inv_norm_p


def mclnpmil_forward(x, weight, bias, p):
    """x: (N, input_size) f32; weight: (output_size, input_size);
    bias: (output_size,); p: scalar f32.
    Returns (Y_prob (output_size,), Y_probs (N, output_size))."""
    n, input_size = x.shape
    output_size = weight.shape[0]

    # Lane-dense padding of the output dimension; N padded to the tile size.
    o_pad = _round_up(output_size, 128)
    tile_n = min(512, _round_up(n, 8))
    n_pad = _round_up(n, tile_n)

    f32 = jnp.float32
    w_t = jnp.zeros((input_size, o_pad), f32).at[:, :output_size].set(
        weight.T.astype(f32))
    b2 = jnp.zeros((1, o_pad), f32).at[:, :output_size].set(bias.astype(f32))
    x_p = jnp.zeros((n_pad, input_size), f32).at[:n, :].set(x.astype(f32))

    # softplus in the wrapper: numerically stable for large p, and keeps the
    # kernel free of scalar transcendentals / broadcasts.
    norm_p = 1.0 + jax.nn.softplus(jnp.asarray(p, f32))
    scalars = jnp.stack([norm_p, 1.0 / norm_p, jnp.asarray(1.0 / n, f32)])
    n_arr = jnp.array([n], jnp.int32)

    grid = (n_pad // tile_n,)

    y_prob, y_probs = pl.pallas_call(
        _mclnpmil_kernel,
        out_shape=(
            jax.ShapeDtypeStruct((1, o_pad), f32),       # Y_prob (padded)
            jax.ShapeDtypeStruct((n_pad, o_pad), f32),   # Y_probs (padded)
        ),
        grid=grid,
        in_specs=[
            pl.BlockSpec(memory_space=pltpu.SMEM),                     # scalars
            pl.BlockSpec(memory_space=pltpu.SMEM),                     # n
            pl.BlockSpec((tile_n, input_size), lambda i: (i, 0)),      # x tile
            pl.BlockSpec((input_size, o_pad), lambda i: (0, 0)),       # W (resident)
            pl.BlockSpec((1, o_pad), lambda i: (0, 0)),                # bias (resident)
        ],
        out_specs=(
            pl.BlockSpec((1, o_pad), lambda i: (0, 0)),                # Y_prob (resident)
            pl.BlockSpec((tile_n, o_pad), lambda i: (i, 0)),           # Y_probs tile
        ),
        scratch_shapes=[pltpu.VMEM((tile_n, o_pad), f32)],             # accumulator
        compiler_params=pltpu.CompilerParams(
            dimension_semantics=("arbitrary",),   # reduction axis (resident acc/output)
        ),
    )(scalars, n_arr, x_p, w_t, b2)

    return y_prob[0, :output_size], y_probs[:n, :output_size]


def _reference(x, weight, bias, p):
    y_probs = jnp.abs(x @ weight.T + bias)
    norm_p = 1.0 + jax.nn.softplus(p)
    y_prob = jnp.mean(y_probs ** norm_p, axis=0) ** (1.0 / norm_p)
    return y_prob, y_probs


if __name__ == "__main__":
    key = jax.random.PRNGKey(0)
    k_x, k_w, k_b = jax.random.split(key, 3)

    # Small shapes implied by the module: a bag of N=8 instances,
    # input_size=32 features, output_size=4 classes.
    N, INPUT_SIZE, OUTPUT_SIZE = 8, 32, 4
    NORM = 1.0

    x = jax.random.normal(k_x, (N, INPUT_SIZE), dtype=jnp.float32)
    weight = jax.random.normal(k_w, (OUTPUT_SIZE, INPUT_SIZE), dtype=jnp.float32) * 0.1
    bias = jax.random.normal(k_b, (OUTPUT_SIZE,), dtype=jnp.float32) * 0.1
    p = jnp.float32(NORM)

    y_prob, y_probs = jax.jit(mclnpmil_forward)(x, weight, bias, p)
    jax.block_until_ready((y_prob, y_probs))

    ref_prob, ref_probs = _reference(x, weight, bias, p)
    assert y_prob.shape == (OUTPUT_SIZE,)
    assert y_probs.shape == (N, OUTPUT_SIZE)
    assert jnp.allclose(y_probs, ref_probs, atol=1e-5, rtol=1e-5)
    assert jnp.allclose(y_prob, ref_prob, atol=1e-5, rtol=1e-5)

    print("KERNEL_OK")
</pallas_src>

<mosaic_0001>
module attributes {stable_mosaic.version = 11 : i64} {
  func.func @_mclnpmil_kernel(%arg0: i32, %arg1: memref<3xf32, #tpu.memory_space<smem>>, %arg2: memref<1xi32, #tpu.memory_space<smem>>, %arg3: memref<8x32xf32, #tpu.memory_space<vmem>>, %arg4: memref<32x128xf32, #tpu.memory_space<vmem>>, %arg5: memref<1x128xf32, #tpu.memory_space<vmem>>, %arg6: memref<1x128xf32, #tpu.memory_space<vmem>>, %arg7: memref<8x128xf32, #tpu.memory_space<vmem>>, %arg8: memref<8x128xf32, #tpu.memory_space<vmem>>) attributes {dimension_semantics = [#tpu.dimension_semantics<arbitrary>], iteration_bounds = array<i64: 1>, scalar_prefetch = 0 : i64, scratch_operands = 1 : i64, tpu.core_type = #tpu.core_type<tc>, window_params = [{transform_indices = @transform_0, window_bounds = array<i64: 3>}, {transform_indices = @transform_1, window_bounds = array<i64: 1>}, {transform_indices = @transform_2, window_bounds = array<i64: 8, 32>}, {pipeline_mode = #tpu.pipeline_mode<synchronous>, transform_indices = @transform_3, window_bounds = array<i64: 32, 128>}, {pipeline_mode = #tpu.pipeline_mode<synchronous>, transform_indices = @transform_4, window_bounds = array<i64: 1, 128>}, {pipeline_mode = #tpu.pipeline_mode<synchronous>, transform_indices = @transform_5, window_bounds = array<i64: 1, 128>}, {transform_indices = @transform_6, window_bounds = array<i64: 8, 128>}]} {
    %c0_i32 = arith.constant 0 : i32
    %0 = arith.cmpi eq, %arg0, %c0_i32 : i32
    %1 = arith.extui %0 : i1 to i32
    %c0_i32_0 = arith.constant 0 : i32
    %2 = arith.cmpi ne, %1, %c0_i32_0 : i32
    scf.if %2 {
      %cst_17 = arith.constant 0.000000e+00 : f32
      %29 = vector.broadcast %cst_17 : f32 to vector<8x128xf32>
      %c0_18 = arith.constant 0 : index
      %c0_19 = arith.constant 0 : index
      %30 = vector.load %arg8[%c0_18, %c0_19] : memref<8x128xf32, #tpu.memory_space<vmem>>, vector<8x128xf32>
      tpu.vector_store %arg8[%c0_18, %c0_19], %29 {strides = array<i32>} : memref<8x128xf32, #tpu.memory_space<vmem>>, vector<8x128xf32>,
    } else {
    }
    %c0 = arith.constant 0 : index
    %c0_1 = arith.constant 0 : index
    %3 = vector.load %arg3[%c0, %c0_1] : memref<8x32xf32, #tpu.memory_space<vmem>>, vector<8x32xf32>
    %c0_2 = arith.constant 0 : index
    %c0_3 = arith.constant 0 : index
    %4 = vector.load %arg4[%c0_2, %c0_3] : memref<32x128xf32, #tpu.memory_space<vmem>>, vector<32x128xf32>
    %cst = arith.constant dense<0.000000e+00> : vector<8x128xf32>
    %5 = tpu.matmul %3, %4, %cst {dimension_numbers = #tpu.dot_dimension_numbers<[1], [0], [0], [1], [0, 0, 1, 1], [], []>} : vector<8x32xf32>, vector<32x128xf32>, vector<8x128xf32> -> vector<8x128xf32>
    %c0_4 = arith.constant 0 : index
    %c0_5 = arith.constant 0 : index
    %6 = vector.load %arg5[%c0_4, %c0_5] : memref<1x128xf32, #tpu.memory_space<vmem>>, vector<1x128xf32>
    %7 = vector.broadcast %6 : vector<1x128xf32> to vector<8x128xf32>
    %8 = arith.addf %5, %7 : vector<8x128xf32>
    %9 = math.absf %8 : vector<8x128xf32>
    %c0_6 = arith.constant 0 : index
    %c0_7 = arith.constant 0 : index
    %10 = vector.load %arg7[%c0_6, %c0_7] : memref<8x128xf32, #tpu.memory_space<vmem>>, vector<8x128xf32>
    tpu.vector_store %arg7[%c0_6, %c0_7], %9 {strides = array<i32>} : memref<8x128xf32, #tpu.memory_space<vmem>>, vector<8x128xf32>,
    %c0_8 = arith.constant 0 : index
    %11 = memref.load %arg1[%c0_8] : memref<3xf32, #tpu.memory_space<smem>>
    %c8_i32 = arith.constant 8 : i32
    %12 = arith.muli %arg0, %c8_i32 : i32
    %13 = tpu.iota {dimensions = array<i32: 0>} : vector<8x128xi32>
    %14 = vector.broadcast %12 : i32 to vector<8x128xi32>
    %15 = arith.addi %14, %13 : vector<8x128xi32>
    %c0_9 = arith.constant 0 : index
    %16 = memref.load %arg2[%c0_9] : memref<1xi32, #tpu.memory_space<smem>>
    %17 = vector.broadcast %16 : i32 to vector<8x128xi32>
    %18 = arith.cmpi slt, %15, %17 : vector<8x128xi32>
    %19 = vector.broadcast %11 : f32 to vector<8x128xf32>
    %20 = math.powf %9, %19 : vector<8x128xf32>
    %cst_10 = arith.constant 0.000000e+00 : f32
    %21 = vector.broadcast %cst_10 : f32 to vector<8x128xf32>
    %22 = arith.select %18, %20, %21 : vector<8x128xi1>, vector<8x128xf32>
    %c0_11 = arith.constant 0 : index
    %c0_12 = arith.constant 0 : index
    %23 = vector.load %arg8[%c0_11, %c0_12] : memref<8x128xf32, #tpu.memory_space<vmem>>, vector<8x128xf32>
    %24 = arith.addf %23, %22 : vector<8x128xf32>
    %c0_13 = arith.constant 0 : index
    %c0_14 = arith.constant 0 : index
    %25 = vector.load %arg8[%c0_13, %c0_14] : memref<8x128xf32, #tpu.memory_space<vmem>>, vector<8x128xf32>
    tpu.vector_store %arg8[%c0_13, %c0_14], %24 {strides = array<i32>} : memref<8x128xf32, #tpu.memory_space<vmem>>, vector<8x128xf32>,
    %c0_i32_15 = arith.constant 0 : i32
    %26 = arith.cmpi eq, %arg0, %c0_i32_15 : i32
    %27 = arith.extui %26 : i1 to i32
    %c0_i32_16 = arith.constant 0 : i32
    %28 = arith.cmpi ne, %27, %c0_i32_16 : i32
    scf.if %28 {
      %c1 = arith.constant 1 : index
      %29 = memref.load %arg1[%c1] : memref<3xf32, #tpu.memory_space<smem>>
      %c2 = arith.constant 2 : index
      %30 = memref.load %arg1[%c2] : memref<3xf32, #tpu.memory_space<smem>>
      %c0_17 = arith.constant 0 : index
      %c0_18 = arith.constant 0 : index
      %31 = vector.load %arg8[%c0_17, %c0_18] : memref<8x128xf32, #tpu.memory_space<vmem>>, vector<8x128xf32>
      %cst_19 = arith.constant dense<0.000000e+00> : vector<128xf32>
      %32 = vector.multi_reduction <add>, %31, %cst_19 [0] : vector<8x128xf32> to vector<128xf32>
      %33 = vector.shape_cast %32 : vector<128xf32> to vector<1x128xf32>
      %34 = vector.broadcast %30 : f32 to vector<1x128xf32>
      %35 = arith.mulf %33, %34 : vector<1x128xf32>
      %36 = vector.broadcast %29 : f32 to vector<1x128xf32>
      %37 = math.powf %35, %36 : vector<1x128xf32>
      %c0_20 = arith.constant 0 : index
      %c0_21 = arith.constant 0 : index
      %38 = vector.load %arg6[%c0_20, %c0_21] : memref<1x128xf32, #tpu.memory_space<vmem>>, vector<1x128xf32>
      tpu.vector_store %arg6[%c0_20, %c0_21], %37 {strides = array<i32>} : memref<1x128xf32, #tpu.memory_space<vmem>>, vector<1x128xf32>,
    } else {
    }
    return
  }
  func.func @transform_0(%arg0: i32) -> i32 {
    %c0_i32 = arith.constant 0 : i32
    %c0_i32_0 = arith.constant 0 : i32
    return %c0_i32 : i32
  }
  func.func @transform_1(%arg0: i32) -> i32 {
    %c0_i32 = arith.constant 0 : i32
    %c0_i32_0 = arith.constant 0 : i32
    return %c0_i32 : i32
  }
  func.func @transform_2(%arg0: i32) -> (i32, i32) {
    %c0_i32 = arith.constant 0 : i32
    %c0_i32_0 = arith.constant 0 : i32
    return %arg0, %c0_i32 : i32, i32
  }
  func.func @transform_3(%arg0: i32) -> (i32, i32) {
    %c0_i32 = arith.constant 0 : i32
    %c0_i32_0 = arith.constant 0 : i32
    %c0_i32_1 = arith.constant 0 : i32
    return %c0_i32, %c0_i32_0 : i32, i32
  }
  func.func @transform_4(%arg0: i32) -> (i32, i32) {
    %c0_i32 = arith.constant 0 : i32
    %c0_i32_0 = arith.constant 0 : i32
    %c0_i32_1 = arith.constant 0 : i32
    return %c0_i32, %c0_i32_0 : i32, i32
  }
  func.func @transform_5(%arg0: i32) -> (i32, i32) {
    %c0_i32 = arith.constant 0 : i32
    %c0_i32_0 = arith.constant 0 : i32
    %c0_i32_1 = arith.constant 0 : i32
    return %c0_i32, %c0_i32_0 : i32, i32
  }
  func.func @transform_6(%arg0: i32) -> (i32, i32) {
    %c0_i32 = arith.constant 0 : i32
    %c0_i32_0 = arith.constant 0 : i32
    return %arg0, %c0_i32 : i32, i32
  }
}

</mosaic_0001>

<llo_original>
// kernel: mclnpmil_forward.1
$region0: #{mclnpmil_forward.1}
  #allocation0 [shape = 'u32[]', space=smem, size = 0x4, offset = 0x4, fixed_abs, tag = 'smem constant byte address 0x4 - core index']
  #allocation1 [shape = 'u32[144,128]{1,0:T(1,128)}', space=vmem, size = 0x12000, scoped, tag = 'internal scratch']
  #allocation2 [shape = 'f32[8,128]{1,0:T(8,128)}', space=vmem, size = 0x1000, scoped, tag = 'scratch operand']
  #allocation3 [shape = 's32[1]{0:T(128)S(6)}', space=smem, size = 0x200, scoped, tag = 'scoped memory for mclnpmil_forward.1']
  %s0 = inlined_call_operand.vmem [shape: f32[3], index: 0, kind: input, shape index: {}]
  %s1 = inlined_call_operand.<no memory space> [shape: s32[1], index: 1, kind: input, shape index: {}]
  %s2 = inlined_call_operand.vmem [shape: f32[8,32], index: 2, kind: input, shape index: {}]
  %s3 = inlined_call_operand.vmem [shape: f32[32,128], index: 3, kind: input, shape index: {}]
  %s4 = inlined_call_operand.vmem [shape: f32[1,128], index: 4, kind: input, shape index: {}]
  %s5 = inlined_call_operand.vmem [shape: f32[1,128], index: 5, kind: output, shape index: {0}]
  %s6 = inlined_call_operand.vmem [shape: f32[8,128], index: 6, kind: output, shape index: {1}]
  %7 = xla_tuple %s5, %s6
  %s8 = sld [smem:[#allocation0]]
  $region50: #{mclnpmil_forward.1} parent=0
    _
  %s10 = ssub.s32 1, %s8
  %s11 = scalar_select 0, %s10, %s8
  %12 = sst [smem:[#allocation3]] %s1
  $region1: #{mclnpmil_forward.1} parent=0
    #allocation4 [shape = 'u8[512]{0}', space=smem, size = 0x200, scoped, tag = 'input window, operand 0, single buffered']
    #allocation5 [shape = 's32[1]{0}', space=sflag, size = 0x4, scoped, tag = 'scoped memory for mclnpmil_forward.1']
    %13 = vsyncpa [#allocation5], 0
    // Predicated region
    $region2: #{mclnpmil_forward.1} parent=1 // pred_check
      _
    $region3: #{mclnpmil_forward.1} parent=1 // pred_check_branch
      %15 = sbr.rel (0) target = $region5
    $region4: #{mclnpmil_forward.1} parent=1 // pred_region
      %s17 = ssub.s32 16, 16
      %18 = vsyncadd [#allocation5], %s17
      %s20 = sshll.u32 %s0, 4
      %s21 = int_to_ptr.vmem [resolvable:$true] %s20
      %23 = dma.vmem_to_smem %s21, 16, [#allocation4], [#allocation5]
    $region5: #{mclnpmil_forward.1} parent=1 // pred_fallthru
      _
    // Predicated region
    $region6: #{mclnpmil_forward.1} parent=1 // pred_check
      _
    $region7: #{mclnpmil_forward.1} parent=1 // pred_check_branch
      %25 = sbr.rel (0) target = $region9
    $region8: #{mclnpmil_forward.1} parent=1 // pred_region
      _
    $region9: #{mclnpmil_forward.1} parent=1 // pred_fallthru
      _
    // Predicated region
    $region10: #{mclnpmil_forward.1} parent=1 // pred_check
      _
    $region11: #{mclnpmil_forward.1} parent=1 // pred_check_branch
      %27 = sbr.rel (0) target = $region13
    $region12: #{mclnpmil_forward.1} parent=1 // pred_region
      _
    $region13: #{mclnpmil_forward.1} parent=1 // pred_fallthru
      _
    // Predicated region
    $region14: #{mclnpmil_forward.1} parent=1 // pred_check
      _
    $region15: #{mclnpmil_forward.1} parent=1 // pred_check_branch
      %29 = sbr.rel (0) target = $region17
    $region16: #{mclnpmil_forward.1} parent=1 // pred_region
      _
    $region17: #{mclnpmil_forward.1} parent=1 // pred_fallthru
      _
    // Predicated region
    $region18: #{mclnpmil_forward.1} parent=1 // pred_check
      _
    $region19: #{mclnpmil_forward.1} parent=1 // pred_check_branch
      %31 = sbr.rel (0) target = $region21
    $region20: #{mclnpmil_forward.1} parent=1 // pred_region
      _
    $region21: #{mclnpmil_forward.1} parent=1 // pred_fallthru
      _
    // Predicated region
    $region22: #{mclnpmil_forward.1} parent=1 // pred_check
      _
    $region23: #{mclnpmil_forward.1} parent=1 // pred_check_branch
      %33 = sbr.rel (0) target = $region25
    $region24: #{mclnpmil_forward.1} parent=1 // pred_region
      %34 = dma.done [#allocation5], 16
    $region25: #{mclnpmil_forward.1} parent=1 // pred_fallthru
      _
    %35 = sfence
    %p36 = scmp.eq.s32.totalorder 0, 0
    // Predicated region
    $region26: #{mclnpmil_forward.1} parent=1 // pred_check
      %p37 = pneg %p36
    $region27: #{mclnpmil_forward.1} parent=1 // pred_check_branch
      %39 = sbr.rel (%p37) target = $region29
    $region28: #{mclnpmil_forward.1} parent=1 // pred_region
      %40 = vst [vmem:[#allocation2] sm:$0xff] 0.0
    $region29: #{mclnpmil_forward.1} parent=1 // pred_fallthru
      _
    %v41 = vld [vmem:[%s2] sm:$0xff]
    %v42 = vld [vmem:[%s3] sm:$0xff]
    %v43 = vld [vmem:[%s3 + $0x8] sm:$0xff]
    %v44 = vld [vmem:[%s3 + $0x10] sm:$0xff]
    %v45 = vld [vmem:[%s3 + $0x18] sm:$0xff]
    %v46 = vld [vmem:[%s4] sm:$0x1]
    %v48 = vlaneseq
    %v49 = vshrl.u32 %v48, 7
    %v50 = vsub.s32 0, %v49
    %v51 = vrot.slane %v46, %v50
    %vm53 = vcmask 261120
    %v55 = vsel %vm53, %v41, 0
    %57 = vmatprep.subr.mxu0 0.0
    %58 = vmatpush1.msra.mxu0 %v42
    %59 = vmatprep.subr.mxu0 0.0
    %60 = vmatpush1.msra.mxu0 %v43
    %61 = vmatprep.subr.mxu0 0.0
    %62 = vmatpush1.msra.mxu0 %v44
    %63 = vmatprep.subr.mxu0 0.0
    %64 = vmatpush1.msra.mxu0 %v45
    %65 = vmatprep.subr.mxu0 0.0
    %66 = vmatpush1.msra.mxu0 0.0
    %67 = vmatprep.subr.mxu0 0.0
    %68 = vmatpush1.msra.mxu0 0.0
    %69 = vmatprep.subr.mxu0 0.0
    %70 = vmatpush1.msra.mxu0 0.0
    %71 = vmatprep.subr.mxu0 0.0
    %72 = vmatpush1.msra.mxu0 0.0
    %73 = vmatprep.subr.mxu0 0.0
    %74 = vmatpush1.msra.mxu0 0.0
    %75 = vmatprep.subr.mxu0 0.0
    %76 = vmatpush1.msra.mxu0 0.0
    %77 = vmatprep.subr.mxu0 0.0
    %78 = vmatpush1.msra.mxu0 0.0
    %79 = vmatprep.subr.mxu0 0.0
    %80 = vmatpush1.msra.mxu0 0.0
    %81 = vmatprep.subr.mxu0 0.0
    %82 = vmatpush1.msra.mxu0 0.0
    %83 = vmatprep.subr.mxu0 0.0
    %84 = vmatpush1.msra.mxu0 0.0
    %85 = vmatprep.subr.mxu0 0.0
    %86 = vmatpush1.msra.mxu0 0.0
    %87 = vmatprep.subr.mxu0 0.0
    %88 = vmatpush1.msra.mxu0 0.0
    %89 = vmatprep.subr.mxu0 0.0
    %90 = vmatpush1.msra.mxu0 0.0
    %91 = vmatprep.subr.mxu0 0.0
    %92 = vmatpush1.msra.mxu0 0.0
    %93 = vmatprep.subr.mxu0 0.0
    %94 = vmatpush1.msra.mxu0 0.0
    %95 = vmatprep.subr.mxu0 0.0
    %96 = vmatpush1.msra.mxu0 0.0
    %97 = vmatprep.subr.mxu0 0.0
    %98 = vmatpush1.msra.mxu0 0.0
    %99 = vmatprep.subr.mxu0 0.0
    %100 = vmatpush1.msra.mxu0 0.0
    %101 = vmatprep.subr.mxu0 0.0
    %102 = vmatpush1.msra.mxu0 0.0
    %103 = vmatprep.subr.mxu0 0.0
    %104 = vmatpush1.msra.mxu0 0.0
    %105 = vmatprep.subr.mxu0 0.0
    %106 = vmatpush1.msra.mxu0 0.0
    %107 = vmatprep.subr.mxu0 0.0
    %108 = vmatpush1.msra.mxu0 0.0
    %109 = vmatprep.subr.mxu0 0.0
    %110 = vmatpush1.msra.mxu0 0.0
    %111 = vmatprep.subr.mxu0 0.0
    %112 = vmatpush1.msra.mxu0 0.0
    %113 = vmatprep.subr.mxu0 0.0
    %114 = vmatpush1.msra.mxu0 0.0
    %115 = vmatprep.subr.mxu0 0.0
    %116 = vmatpush1.msra.mxu0 0.0
    %117 = vmatprep.subr.mxu0 0.0
    %118 = vmatpush1.msra.mxu0 0.0
    %119 = vmatprep.subr.mxu0 0.0
    %120 = vmatpush1.msra.mxu0 0.0
    %121 = vmatprep.mubr.f32.mxu0 0.0
    %122 = vmatmul.mubr.f32.gmra.mrb[0].mxu0 %v55
    %v123 = vpop.f32.mrb[0].mxu0
    %v124 = vadd.f32 %v51, %v123
    %v125 = vpop.f32.mrb[0].mxu0
    %126 = vdwg.mxu0
    %v127 = vand.u32 2147483647, %v124
    %128 = vst [vmem:[%s6] sm:$0xff] %v127
    %s129 = sld [smem:[#allocation4]]
    %s130 = smul.u32 0, 8
    %v131 = vlaneseq
    %v132 = vshrl.u32 %v131, 7
    %v133 = vstv %s130
    %v134 = vadd.s32 %v133, %v132
    %s135 = sld [smem:[#allocation3]]
    %v136 = vstv %s135
    %vm137 = vcmp.lt.s32.totalorder %v134, %v136
    %v138 = vstv %s129
    %v139 = vpow.f32 %v127, %v138
    %v140 = vsel %vm137, %v139, 0.0
    %v141 = vld [vmem:[#allocation2] sm:$0xff]
    %v142 = vadd.f32 %v141, %v140
    %143 = vst [vmem:[#allocation2] sm:$0xff] %v142
    // Predicated region
    $region30: #{mclnpmil_forward.1} parent=1 // pred_check
      %p144 = pneg %p36
    $region31: #{mclnpmil_forward.1} parent=1 // pred_check_branch
      %146 = sbr.rel (%p144) target = $region33
    $region32: #{mclnpmil_forward.1} parent=1 // pred_region
      %s147 = sld [smem:[#allocation4 + $0x1]]
      %s148 = sld [smem:[#allocation4 + $0x2]]
      %v149 = vld [vmem:[#allocation2] sm:$0xff]
      %v150 = vrot.slane %v149, 4
      %v151 = vadd.f32 %v149, %v150
      %v152 = vrot.slane %v151, 2
      %v153 = vadd.f32 %v151, %v152
      %v154 = vrot.slane %v153, 1
      %v155 = vadd.f32 %v153, %v154
      %v156 = vstv %s148
      %v157 = vmul.f32 %v155, %v156
      %v158 = vstv %s147
      %v159 = vpow.f32 %v157, %v158
      %160 = vst [vmem:[%s5] sm:$0x1] %v159
    $region33: #{mclnpmil_forward.1} parent=1 // pred_fallthru
      _
    // Predicated region
    $region34: #{mclnpmil_forward.1} parent=1 // pred_check
      _
    $region35: #{mclnpmil_forward.1} parent=1 // pred_check_branch
      %162 = sbr.rel (0) target = $region37
    $region36: #{mclnpmil_forward.1} parent=1 // pred_region
      _
    $region37: #{mclnpmil_forward.1} parent=1 // pred_fallthru
      _
    // Predicated region
    $region38: #{mclnpmil_forward.1} parent=1 // pred_check
      _
    $region39: #{mclnpmil_forward.1} parent=1 // pred_check_branch
      %164 = sbr.rel (0) target = $region41
    $region40: #{mclnpmil_forward.1} parent=1 // pred_region
      _
    $region41: #{mclnpmil_forward.1} parent=1 // pred_fallthru
      _
    // Predicated region
    $region42: #{mclnpmil_forward.1} parent=1 // pred_check
      _
    $region43: #{mclnpmil_forward.1} parent=1 // pred_check_branch
      %166 = sbr.rel (0) target = $region45
    $region44: #{mclnpmil_forward.1} parent=1 // pred_region
      _
    $region45: #{mclnpmil_forward.1} parent=1 // pred_fallthru
      _
    // Predicated region
    $region46: #{mclnpmil_forward.1} parent=1 // pred_check
      _
    $region47: #{mclnpmil_forward.1} parent=1 // pred_check_branch
      %168 = sbr.rel (0) target = $region49
    $region48: #{mclnpmil_forward.1} parent=1 // pred_region
      _
    $region49: #{mclnpmil_forward.1} parent=1 // pred_fallthru
      _
    %169 = vsyncpa [#allocation5], 1

</llo_original>
